<compile_context>
chip_gen: v7x
topology: tpu7x:2x2x1
jax: 0.10.0
libtpu: 0.0.40
codegen_flags: <defaults>
</compile_context>

<pallas_src>
import functools

import jax
import jax.numpy as jnp
from jax.experimental import pallas as pl
from jax.experimental.pallas import tpu as pltpu

_MIB = 1024 * 1024


def _cdiv(a, b):
    return -(-a // b)


def _ceil_to(v, m):
    return ((v + m - 1) // m) * m


def _tpu_vmem_capacity_bytes():
    """Physical VMEM per TensorCore; conservative default if the query fails."""
    try:
        cap = getattr(pltpu.get_tpu_info(), "vmem_capacity_bytes", None)
        if cap:
            return int(cap)
    except Exception:  # interpret mode / non-TPU backend / older API
        pass
    return 64 * _MIB  # v7x per-TC size: a safe lower bound for v5e/v6e too.


def _vmem_limit_bytes(capacity):
    # ~64 MiB on v5e/v6e (128 MiB physical), ~48 MiB on v7x (64 MiB physical).
    return int(min(capacity * 3 // 4, 64 * _MIB))


def _sublane_align(itemsize):
    # Sublane packing: 8 rows/vreg for 4-byte dtypes, 16 for 2-byte, 32 for 1-byte.
    return max(8, 32 // max(1, itemsize))


def _bytes_per_row(d, itemsize):
    # Double-buffered input + output tiles (4x) plus ~3x f32 intermediates
    # materialized inside the kernel (x_f32, x*x, out_f32).
    return 4 * d * itemsize + 3 * d * 4


def _choose_tile_rows(rows, d, itemsize, vmem_limit, requested=None):
    """Row-tile size: bytes-targeted (~8 MiB input blocks), VMEM-budgeted
    (including f32 intermediates), sublane-aligned, preferring >=8 grid steps
    so both v7x TensorCores actually pipeline."""
    align = _sublane_align(itemsize)

    if requested is not None:
        tile = min(requested, rows)
        if tile < align:
            return rows
        return (tile // align) * align

    row_bytes_in = max(1, d * itemsize)
    budget = max(vmem_limit - 4 * _MIB, 2 * _MIB)

    tile_vmem_cap = max(align, budget // _bytes_per_row(d, itemsize))
    # ~8 MiB per input block amortizes the ~0.35 us/step overhead on all gens.
    tile_target = max(align, (8 * _MIB) // row_bytes_in)

    tile = min(tile_target, tile_vmem_cap, rows)
    if tile < align:
        # Tiny inputs: the block must equal the full row extent to satisfy the
        # (8,128)-divisible-or-full-dim BlockSpec rule.
        return rows
    tile = (tile // align) * align

    # Prefer >=8 grid steps (>=4 per TensorCore on v7x) while keeping each
    # block >= ~1 MiB so per-step fixed cost stays negligible.
    if rows >= 2 * align:
        min_tile = _ceil_to(max(align, _cdiv(_MIB, row_bytes_in)), align)
        cand = _ceil_to(_cdiv(rows, 8), align)
        tile = min(tile, max(cand, min_tile, align))

    return max(tile, align)


def _rmsnorm_kernel(x_ref, scale_ref, o_ref, *, eps):
    # x_ref: (tile_rows, d_model), scale_ref: (1, d_model)
    x = x_ref[...].astype(jnp.float32)
    mean_sq = jnp.mean(x * x, axis=-1, keepdims=True)     # XLU lane reduction
    inv_rms = jax.lax.rsqrt(mean_sq + eps)                 # EUP rsqrt (free slot)
    out = scale_ref[...].astype(jnp.float32) * (x * inv_rms)
    o_ref[...] = out.astype(o_ref.dtype)


def _sumsq_inv_rms_kernel(x_ref, inv_ref, *, eps, d_model, d_chunk, ragged_d):
    # Pass 1 of the large-d_model path: accumulate sum(x^2) over d-chunks into
    # the f32 output (resident across the "arbitrary" axis); finalize to inv_rms.
    j = pl.program_id(1)

    @pl.when(j == 0)
    def _():
        inv_ref[...] = jnp.zeros_like(inv_ref)

    x = x_ref[...].astype(jnp.float32)
    if ragged_d:
        col = j * d_chunk + jax.lax.broadcasted_iota(jnp.int32, x.shape, 1)
        x = jnp.where(col < d_model, x, 0.0)
    inv_ref[...] += jnp.sum(x * x, axis=-1, keepdims=True)

    @pl.when(j == pl.num_programs(1) - 1)
    def _():
        inv_ref[...] = jax.lax.rsqrt(inv_ref[...] * (1.0 / d_model) + eps)


def _apply_scale_kernel(x_ref, inv_ref, scale_ref, o_ref):
    # Pass 2 of the large-d_model path: out = scale * x * inv_rms (elementwise).
    x = x_ref[...].astype(jnp.float32)
    out = scale_ref[...].astype(jnp.float32) * (x * inv_ref[...])
    o_ref[...] = out.astype(o_ref.dtype)


def _rmsnorm_fused(x2d, scale2d, eps, rows, d_model, itemsize, vmem_limit,
                   tile_rows):
    tile = _choose_tile_rows(rows, d_model, itemsize, vmem_limit, tile_rows)
    grid = (pl.cdiv(rows, tile),)

    # Advisory hint: this op is HBM-bandwidth bound (~4 flops/element).
    cost = pl.CostEstimate(
        flops=4 * rows * d_model,
        transcendentals=rows,
        bytes_accessed=2 * rows * d_model * itemsize
        + d_model * jnp.dtype(scale2d.dtype).itemsize,
    )

    return pl.pallas_call(
        functools.partial(_rmsnorm_kernel, eps=eps),
        out_shape=jax.ShapeDtypeStruct((rows, d_model), x2d.dtype),
        grid_spec=pltpu.PrefetchScalarGridSpec(
            num_scalar_prefetch=0,
            grid=grid,
            in_specs=[
                pl.BlockSpec((tile, d_model), lambda i: (i, 0)),
                pl.BlockSpec((1, d_model), lambda i: (0, 0)),
            ],
            out_specs=pl.BlockSpec((tile, d_model), lambda i: (i, 0)),
        ),
        compiler_params=pltpu.CompilerParams(
            dimension_semantics=("parallel",),
            vmem_limit_bytes=vmem_limit,
        ),
        cost_estimate=cost,
    )(x2d, scale2d)


def _rmsnorm_chunked(x2d, scale2d, eps, rows, d_model, itemsize, vmem_limit,
                     tile_rows, d_chunk):
    tile = _choose_tile_rows(rows, d_chunk, itemsize, vmem_limit, tile_rows)
    n_row = pl.cdiv(rows, tile)
    n_d = pl.cdiv(d_model, d_chunk)
    ragged_d = (d_model % d_chunk) != 0

    inv_rms = pl.pallas_call(
        functools.partial(_sumsq_inv_rms_kernel, eps=eps, d_model=d_model,
                          d_chunk=d_chunk, ragged_d=ragged_d),
        out_shape=jax.ShapeDtypeStruct((rows, 1), jnp.float32),
        grid_spec=pltpu.PrefetchScalarGridSpec(
            num_scalar_prefetch=0,
            grid=(n_row, n_d),
            in_specs=[pl.BlockSpec((tile, d_chunk), lambda i, j: (i, j))],
            out_specs=pl.BlockSpec((tile, 1), lambda i, j: (i, 0)),
        ),
        compiler_params=pltpu.CompilerParams(
            dimension_semantics=("parallel", "arbitrary"),
            vmem_limit_bytes=vmem_limit,
        ),
    )(x2d)

    return pl.pallas_call(
        _apply_scale_kernel,
        out_shape=jax.ShapeDtypeStruct((rows, d_model), x2d.dtype),
        grid_spec=pltpu.PrefetchScalarGridSpec(
            num_scalar_prefetch=0,
            grid=(n_row, n_d),
            in_specs=[
                pl.BlockSpec((tile, d_chunk), lambda i, j: (i, j)),
                pl.BlockSpec((tile, 1), lambda i, j: (i, 0)),
                pl.BlockSpec((1, d_chunk), lambda i, j: (0, j)),
            ],
            out_specs=pl.BlockSpec((tile, d_chunk), lambda i, j: (i, j)),
        ),
        compiler_params=pltpu.CompilerParams(
            dimension_semantics=("parallel", "parallel"),
            vmem_limit_bytes=vmem_limit,
        ),
    )(x2d, inv_rms, scale2d)


def rmsnorm(x, scale, *, eps=1e-6, tile_rows=None, d_chunk=None):
    """RMSNorm over the last axis of x, scaled by `scale` (shape (d_model,))."""
    orig_shape = x.shape
    d_model = orig_shape[-1]
    rows = 1
    for s in orig_shape[:-1]:
        rows *= s

    x2d = x.reshape(rows, d_model)
    scale2d = scale.reshape(1, d_model)

    itemsize = jnp.dtype(x.dtype).itemsize
    align = _sublane_align(itemsize)
    vmem_limit = _vmem_limit_bytes(_tpu_vmem_capacity_bytes())
    budget = max(vmem_limit - 4 * _MIB, 2 * _MIB)

    need_chunk = d_chunk is not None
    if not need_chunk and _bytes_per_row(d_model, itemsize) * align > budget:
        # Even an `align`-row block of the full d_model (plus f32 intermediates)
        # does not fit the VMEM budget (the v7x 64 MiB cliff): auto-pick a
        # d-chunk that does.
        per_elem = 4 * itemsize + 3 * 4
        d_chunk = max(128, (budget // (align * per_elem)) // 128 * 128)
        need_chunk = True

    if need_chunk:
        d_chunk = min(int(d_chunk), d_model)
        if d_chunk < d_model:
            d_chunk = max(128, (d_chunk // 128) * 128)  # lane-tiling rule

    if (not need_chunk) or d_chunk >= d_model:
        out = _rmsnorm_fused(x2d, scale2d, eps, rows, d_model, itemsize,
                             vmem_limit, tile_rows)
    else:
        out = _rmsnorm_chunked(x2d, scale2d, eps, rows, d_model, itemsize,
                               vmem_limit, tile_rows, d_chunk)
    return out.reshape(orig_shape)


def rmsnorm_ref(x, scale, eps=1e-6):
    xf = x.astype(jnp.float32)
    norm_x = xf * jax.lax.rsqrt(jnp.mean(xf * xf, axis=-1, keepdims=True) + eps)
    return (scale.astype(jnp.float32) * norm_x).astype(x.dtype)


if __name__ == "__main__":
    d_model = 512
    batch, seq = 2, 8

    key = jax.random.PRNGKey(0)
    x = jax.random.normal(key, (batch, seq, d_model), dtype=jnp.float32)
    # nn.Parameter(torch.ones(d_model)) -> deterministic ones init
    scale = jnp.ones((d_model,), dtype=jnp.float32)

    ref = rmsnorm_ref(x, scale, eps=1e-6)

    # Main (fused) path.
    out = jax.block_until_ready(rmsnorm(x, scale, eps=1e-6))
    assert out.shape == x.shape and out.dtype == x.dtype
    assert jnp.allclose(out, ref, atol=1e-5, rtol=1e-5), "fused path mismatch"

    # Exercise the large-d_model fallback (d_model split across an "arbitrary"
    # grid axis with an f32 sum-of-squares accumulator) by forcing d_chunk.
    out_c = jax.block_until_ready(rmsnorm(x, scale, eps=1e-6, d_chunk=256))
    assert out_c.shape == x.shape and out_c.dtype == x.dtype
    assert jnp.allclose(out_c, ref, atol=1e-5, rtol=1e-5), "chunked path mismatch"

    print("KERNEL_OK")
</pallas_src>

<mosaic_0001>
module attributes {stable_mosaic.version = 11 : i64} {
  func.func @_rmsnorm_kernel(%arg0: i32, %arg1: memref<16x512xf32, #tpu.memory_space<vmem>>, %arg2: memref<1x512xf32, #tpu.memory_space<vmem>>, %arg3: memref<16x512xf32, #tpu.memory_space<vmem>>) attributes {dimension_semantics = [#tpu.dimension_semantics<parallel>], iteration_bounds = array<i64: 1>, scalar_prefetch = 0 : i64, scratch_operands = 0 : i64, tpu.core_type = #tpu.core_type<tc>, window_params = [{transform_indices = @transform_0, window_bounds = array<i64: 16, 512>}, {pipeline_mode = #tpu.pipeline_mode<synchronous>, transform_indices = @transform_1, window_bounds = array<i64: 1, 512>}, {transform_indices = @transform_2, window_bounds = array<i64: 16, 512>}]} {
    %c0 = arith.constant 0 : index
    %c0_0 = arith.constant 0 : index
    %0 = vector.load %arg1[%c0, %c0_0] : memref<16x512xf32, #tpu.memory_space<vmem>>, vector<16x512xf32>
    %1 = arith.mulf %0, %0 : vector<16x512xf32>
    %cst = arith.constant dense<0.000000e+00> : vector<16xf32>
    %2 = vector.multi_reduction <add>, %1, %cst [1] : vector<16x512xf32> to vector<16xf32>
    %3 = vector.shape_cast %2 : vector<16xf32> to vector<16x1xf32>
    %cst_1 = arith.constant 5.120000e+02 : f32
    %4 = vector.broadcast %cst_1 : f32 to vector<16x1xf32>
    %5 = arith.divf %3, %4 : vector<16x1xf32>
    %cst_2 = arith.constant 9.99999997E-7 : f32
    %6 = vector.broadcast %cst_2 : f32 to vector<16x1xf32>
    %7 = arith.addf %5, %6 : vector<16x1xf32>
    %8 = math.rsqrt %7 : vector<16x1xf32>
    %c0_3 = arith.constant 0 : index
    %c0_4 = arith.constant 0 : index
    %9 = vector.load %arg2[%c0_3, %c0_4] : memref<1x512xf32, #tpu.memory_space<vmem>>, vector<1x512xf32>
    %10 = vector.broadcast %8 : vector<16x1xf32> to vector<16x512xf32>
    %11 = arith.mulf %0, %10 : vector<16x512xf32>
    %12 = vector.broadcast %9 : vector<1x512xf32> to vector<16x512xf32>
    %13 = arith.mulf %12, %11 : vector<16x512xf32>
    %c0_5 = arith.constant 0 : index
    %c0_6 = arith.constant 0 : index
    %14 = vector.load %arg3[%c0_5, %c0_6] : memref<16x512xf32, #tpu.memory_space<vmem>>, vector<16x512xf32>
    tpu.vector_store %arg3[%c0_5, %c0_6], %13 {strides = array<i32>} : memref<16x512xf32, #tpu.memory_space<vmem>>, vector<16x512xf32>,
    return
  }
  func.func @transform_0(%arg0: i32) -> (i32, i32) {
    %c0_i32 = arith.constant 0 : i32
    %c0_i32_0 = arith.constant 0 : i32
    return %arg0, %c0_i32 : i32, i32
  }
  func.func @transform_1(%arg0: i32) -> (i32, i32) {
    %c0_i32 = arith.constant 0 : i32
    %c0_i32_0 = arith.constant 0 : i32
    %c0_i32_1 = arith.constant 0 : i32
    return %c0_i32, %c0_i32_0 : i32, i32
  }
  func.func @transform_2(%arg0: i32) -> (i32, i32) {
    %c0_i32 = arith.constant 0 : i32
    %c0_i32_0 = arith.constant 0 : i32
    return %arg0, %c0_i32 : i32, i32
  }
}

</mosaic_0001>

<llo_original>
// kernel: tpu_custom_call.1
$region0: #{tpu_custom_call.1}
  #allocation0 [shape = 'u32[]', space=smem, size = 0x4, offset = 0x4, fixed_abs, tag = 'smem constant byte address 0x4 - core index']
  #allocation1 [shape = 'u32[144,128]{1,0:T(1,128)}', space=vmem, size = 0x12000, scoped, tag = 'internal scratch']
  %s0 = inlined_call_operand.hbm [shape: f32[16,512], index: 0, kind: input, shape index: {}]
  %s1 = inlined_call_operand.hbm [shape: f32[1,512], index: 1, kind: input, shape index: {}]
  %s2 = inlined_call_operand.hbm [shape: f32[16,512], index: 2, kind: output, shape index: {}]
  %s3 = sld [smem:[#allocation0]]
  $region26: #{tpu_custom_call.1} parent=0
    _
  %s5 = ssub.s32 1, %s3
  %s6 = scalar_select 0, %s5, %s3
  $region1: #{tpu_custom_call.1} parent=0
    #allocation2 [shape = 'u8[32768]{0}', space=vmem, size = 0x8000, scoped, tag = 'input window, operand 0, single buffered']
    #allocation3 [shape = 's32[1]{0}', space=sflag, size = 0x4, scoped, tag = 'scoped memory for tpu_custom_call.1']
    #allocation4 [shape = 's32[1]{0}', space=sflag, size = 0x4, scoped, tag = 'scoped memory for tpu_custom_call.1']
    #allocation5 [shape = 'u8[2048]{0}', space=vmem, size = 0x800, scoped, tag = 'input window, operand 1, single buffered']
    #allocation6 [shape = 's32[1]{0}', space=sflag, size = 0x4, scoped, tag = 'scoped memory for tpu_custom_call.1']
    #allocation7 [shape = 'u8[32768]{0}', space=vmem, size = 0x8000, scoped, tag = 'output window, operand 0, single buffered']
    %7 = vsyncpa [#allocation3], 0
    %8 = vsyncpa [#allocation6], 0
    %9 = vsyncpa [#allocation4], 0
    // Predicated region
    $region2: #{tpu_custom_call.1} parent=1 // pred_check
      _
    $region3: #{tpu_custom_call.1} parent=1 // pred_check_branch
      %11 = sbr.rel (0) target = $region5
    $region4: #{tpu_custom_call.1} parent=1 // pred_region
      %s13 = ssub.s32 1024, 1024
      %14 = vsyncadd [#allocation3], %s13
      %s15 = sshll.u32 [#allocation2], 4
      %s16 = int_to_ptr.vmem [resolvable:$true] %s15
      %21 = dma.hbm_to_vmem [thread:$0]  %s0, 1024, %s16, [#allocation3], 512, 512, 32
    $region5: #{tpu_custom_call.1} parent=1 // pred_fallthru
      _
    // Predicated region
    $region6: #{tpu_custom_call.1} parent=1 // pred_check
      _
    $region7: #{tpu_custom_call.1} parent=1 // pred_check_branch
      %23 = sbr.rel (0) target = $region9
    $region8: #{tpu_custom_call.1} parent=1 // pred_region
      %s25 = ssub.s32 64, 64
      %26 = vsyncadd [#allocation6], %s25
      %s28 = sshll.u32 [#allocation5], 4
      %s29 = int_to_ptr.vmem [resolvable:$true] %s28
      %31 = dma.hbm_to_vmem [thread:$0]  %s1, 64, %s29, [#allocation6]
    $region9: #{tpu_custom_call.1} parent=1 // pred_fallthru
      _
    // Predicated region
    $region10: #{tpu_custom_call.1} parent=1 // pred_check
      _
    $region11: #{tpu_custom_call.1} parent=1 // pred_check_branch
      %33 = sbr.rel (0) target = $region13
    $region12: #{tpu_custom_call.1} parent=1 // pred_region
      %34 = dma.done [#allocation3], 1024
    $region13: #{tpu_custom_call.1} parent=1 // pred_fallthru
      _
    // Predicated region
    $region14: #{tpu_custom_call.1} parent=1 // pred_check
      _
    $region15: #{tpu_custom_call.1} parent=1 // pred_check_branch
      %36 = sbr.rel (0) target = $region17
    $region16: #{tpu_custom_call.1} parent=1 // pred_region
      %37 = dma.done [#allocation6], 64
    $region17: #{tpu_custom_call.1} parent=1 // pred_fallthru
      _
    %v38 = vld [vmem:[#allocation2] sm:$0xff]
    %v39 = vld [vmem:[#allocation2 + $0x8] sm:$0xff]
    %v40 = vld [vmem:[#allocation2 + $0x10] sm:$0xff]
    %v41 = vld [vmem:[#allocation2 + $0x18] sm:$0xff]
    %v42 = vld [vmem:[#allocation2 + $0x20] sm:$0xff]
    %v43 = vld [vmem:[#allocation2 + $0x28] sm:$0xff]
    %v44 = vld [vmem:[#allocation2 + $0x30] sm:$0xff]
    %v45 = vld [vmem:[#allocation2 + $0x38] sm:$0xff]
    %v46 = vmul.f32 %v38, %v38
    %v47 = vmul.f32 %v39, %v39
    %v48 = vmul.f32 %v40, %v40
    %v49 = vmul.f32 %v41, %v41
    %v50 = vmul.f32 %v42, %v42
    %v51 = vmul.f32 %v43, %v43
    %v52 = vmul.f32 %v44, %v44
    %v53 = vmul.f32 %v45, %v45
    %v54 = vadd.f32 %v46, %v47
    %v55 = vadd.f32 %v54, %v48
    %v56 = vadd.f32 %v55, %v49
    %57 = vadd.xlane.f32.xlu0 %v56
    %v58 = vpop.xlane.xlu0 %57
    %v59 = vadd.f32 %v50, %v51
    %v60 = vadd.f32 %v59, %v52
    %v61 = vadd.f32 %v60, %v53
    %62 = vadd.xlane.f32.xlu0 %v61
    %v63 = vpop.xlane.xlu0 %62
    %v64 = vrcp.pop 512.0
    %v65 = vmul.f32 %v58, %v64
    %v66 = vmul.f32 %v63, %v64
    %v67 = vadd.f32 %v65, 1e-06
    %v68 = vadd.f32 %v66, 1e-06
    %v69 = vrsqrt.pop %v67
    %v70 = vrsqrt.pop %v68
    %v71 = vld [vmem:[#allocation5] sm:$0xf]
    %v72 = vmul.f32 %v38, %v69
    %v73 = vmul.f32 %v39, %v69
    %v74 = vmul.f32 %v40, %v69
    %v75 = vmul.f32 %v41, %v69
    %v76 = vmul.f32 %v42, %v70
    %v77 = vmul.f32 %v43, %v70
    %v78 = vmul.f32 %v44, %v70
    %v79 = vmul.f32 %v45, %v70
    %v81 = vlaneseq
    %v82 = vshrl.u32 %v81, 7
    %v83 = vsub.s32 0, %v82
    %v84 = vrot.slane %v71, %v83
    %v85 = vlaneseq
    %v86 = vshrl.u32 %v85, 7
    %v87 = vsub.s32 1, %v86
    %v88 = vrot.slane %v71, %v87
    %v89 = vlaneseq
    %v90 = vshrl.u32 %v89, 7
    %v91 = vsub.s32 2, %v90
    %v92 = vrot.slane %v71, %v91
    %v93 = vlaneseq
    %v94 = vshrl.u32 %v93, 7
    %v95 = vsub.s32 3, %v94
    %v96 = vrot.slane %v71, %v95
    %v101 = vmul.f32 %v84, %v72
    %v102 = vmul.f32 %v88, %v73
    %v103 = vmul.f32 %v92, %v74
    %v104 = vmul.f32 %v96, %v75
    %v105 = vmul.f32 %v84, %v76
    %v106 = vmul.f32 %v88, %v77
    %v107 = vmul.f32 %v92, %v78
    %v108 = vmul.f32 %v96, %v79
    %109 = vst [vmem:[#allocation7] sm:$0xff] %v101
    %110 = vst [vmem:[#allocation7 + $0x8] sm:$0xff] %v102
    %111 = vst [vmem:[#allocation7 + $0x10] sm:$0xff] %v103
    %112 = vst [vmem:[#allocation7 + $0x18] sm:$0xff] %v104
    %113 = vst [vmem:[#allocation7 + $0x20] sm:$0xff] %v105
    %114 = vst [vmem:[#allocation7 + $0x28] sm:$0xff] %v106
    %115 = vst [vmem:[#allocation7 + $0x30] sm:$0xff] %v107
    %116 = vst [vmem:[#allocation7 + $0x38] sm:$0xff] %v108
    // Predicated region
    $region18: #{tpu_custom_call.1} parent=1 // pred_check
      _
    $region19: #{tpu_custom_call.1} parent=1 // pred_check_branch
      %118 = sbr.rel (0) target = $region21
    $region20: #{tpu_custom_call.1} parent=1 // pred_region
      %s120 = ssub.s32 1024, 1024
      %121 = vsyncadd [#allocation4], %s120
      %s122 = sshll.u32 [#allocation7], 4
      %s123 = int_to_ptr.vmem [resolvable:$true] %s122
      %128 = dma.vmem_to_hbm [thread:$0]  %s123, 1024, %s2, [#allocation4], 512, 512, 32
    $region21: #{tpu_custom_call.1} parent=1 // pred_fallthru
      _
    // Predicated region
    $region22: #{tpu_custom_call.1} parent=1 // pred_check
      _
    $region23: #{tpu_custom_call.1} parent=1 // pred_check_branch
      %130 = sbr.rel (0) target = $region25
    $region24: #{tpu_custom_call.1} parent=1 // pred_region
      %131 = dma.done [#allocation4], 1024
    $region25: #{tpu_custom_call.1} parent=1 // pred_fallthru
      _
    %132 = vsyncpa [#allocation3], 1
    %133 = vsyncpa [#allocation6], 1
    %134 = vsyncpa [#allocation4], 1

</llo_original>
